<compile_context>
chip_gen: v5e
topology: v5e:2x2
jax: 0.10.0
libtpu: 0.0.40
codegen_flags: <defaults>
</compile_context>

<pallas_src>
import math
import jax
import jax.numpy as jnp
from jax.experimental import pallas as pl
from jax.experimental.pallas import tpu as pltpu


def _round_up(n: int, m: int) -> int:
    return ((n + m - 1) // m) * m


def ffn_kernel(x_ref, w1_ref, b1_ref, w2_ref, b2_ref, o_ref, acc_ref):
    # x_ref:   (tm, d_model_p)        compute dtype
    # w1_ref:  (d_model_p, tff)       compute dtype
    # b1_ref:  (1, tff)               f32
    # w2_ref:  (tff, d_model_p)       compute dtype
    # b2_ref:  (1, d_model_p)         f32
    # o_ref:   (tm, d_model_p)        output dtype
    # acc_ref: (tm, d_model_p)        f32 accumulator, resident across ff axis
    ff = pl.program_id(1)

    @pl.when(ff == 0)
    def _init():
        acc_ref[...] = jnp.zeros_like(acc_ref)

    # First matmul (MXU) with f32 accumulation; bias + ReLU in f32 on the VPU.
    h = jnp.dot(x_ref[...], w1_ref[...], preferred_element_type=jnp.float32)
    h = jnp.maximum(h + b1_ref[...], 0.0)
    # Dropout (eval mode) == identity.

    # Second matmul: cast activation to the weight dtype (bf16 MXU fast path
    # when compute_dtype=bf16), accumulate in the resident f32 accumulator.
    acc_ref[...] += jnp.dot(h.astype(w2_ref.dtype), w2_ref[...],
                            preferred_element_type=jnp.float32)

    @pl.when(ff == pl.num_programs(1) - 1)
    def _finalize():
        o_ref[...] = (acc_ref[...] + b2_ref[...]).astype(o_ref.dtype)


def feed_forward_block(x, w1, b1, w2, b2, *, tm=256, tff=512, compute_dtype=None):
    """x: (batch, seq, d_model). w1: (d_model, d_ff), b1: (d_ff,),
       w2: (d_ff, d_model), b2: (d_model,). Returns (batch, seq, d_model).

       compute_dtype: dtype fed to the MXU for x/W1/W2 (e.g. jnp.bfloat16).
       Accumulation, biases and ReLU are always f32.  Output keeps x.dtype."""
    orig_dtype = x.dtype
    batch, seq, d_model = x.shape
    d_ff = w1.shape[1]
    assert w1.shape == (d_model, d_ff)
    assert w2.shape == (d_ff, d_model)
    if compute_dtype is None:
        compute_dtype = orig_dtype

    M = batch * seq

    # Pad feature dims to the 128-lane width; pick tiles and pad M / d_ff to them.
    d_model_p = _round_up(d_model, 128)
    d_ff_p = _round_up(d_ff, 128)
    tm = max(8, min(tm, _round_up(M, 8)))
    tff = max(128, min(tff, d_ff_p))
    d_ff_p = _round_up(d_ff_p, tff)
    M_p = _round_up(M, tm)

    x2d = jnp.pad(x.reshape(M, d_model).astype(compute_dtype),
                  ((0, M_p - M), (0, d_model_p - d_model)))
    w1_p = jnp.pad(w1.astype(compute_dtype),
                   ((0, d_model_p - d_model), (0, d_ff_p - d_ff)))
    w2_p = jnp.pad(w2.astype(compute_dtype),
                   ((0, d_ff_p - d_ff), (0, d_model_p - d_model)))
    b1_p = jnp.pad(b1.astype(jnp.float32), (0, d_ff_p - d_ff)).reshape(1, d_ff_p)
    b2_p = jnp.pad(b2.astype(jnp.float32), (0, d_model_p - d_model)).reshape(1, d_model_p)

    grid = (M_p // tm, d_ff_p // tff)

    # VMEM budget: double-buffered tiles + accumulator + h intermediate.
    csz = jnp.dtype(compute_dtype).itemsize
    osz = jnp.dtype(orig_dtype).itemsize
    vmem_needed = (
        2 * tm * d_model_p * csz          # x tile
        + 2 * d_model_p * tff * csz       # W1 tile
        + 2 * tff * d_model_p * csz       # W2 tile
        + 2 * 8 * tff * 4                 # b1
        + 2 * 8 * d_model_p * 4           # b2
        + 2 * tm * d_model_p * osz        # out tile
        + tm * d_model_p * 4              # f32 accumulator scratch
        + tm * tff * 4                    # h intermediate
    )
    vmem_limit = int(min(max(2 * vmem_needed, 32 * 1024 * 1024),
                         96 * 1024 * 1024))

    cost = pl.CostEstimate(
        flops=2 * 2 * M * d_model * d_ff,
        transcendentals=0,
        bytes_accessed=(x2d.size * csz + w1_p.size * csz + w2_p.size * csz
                        + b1_p.size * 4 + b2_p.size * 4 + M_p * d_model_p * osz),
    )

    out2d = pl.pallas_call(
        ffn_kernel,
        out_shape=jax.ShapeDtypeStruct((M_p, d_model_p), orig_dtype),
        grid_spec=pltpu.PrefetchScalarGridSpec(
            num_scalar_prefetch=0,
            grid=grid,
            in_specs=[
                pl.BlockSpec((tm, d_model_p), lambda i, j: (i, 0)),   # x tile
                pl.BlockSpec((d_model_p, tff), lambda i, j: (0, j)),  # W1 tile
                pl.BlockSpec((1, tff), lambda i, j: (0, j)),          # b1 tile
                pl.BlockSpec((tff, d_model_p), lambda i, j: (j, 0)),  # W2 tile
                pl.BlockSpec((1, d_model_p), lambda i, j: (0, 0)),    # b2
            ],
            out_specs=pl.BlockSpec((tm, d_model_p), lambda i, j: (i, 0)),
            scratch_shapes=[pltpu.VMEM((tm, d_model_p), jnp.float32)],
        ),
        compiler_params=pltpu.CompilerParams(
            dimension_semantics=("parallel", "arbitrary"),
            vmem_limit_bytes=vmem_limit,
        ),
        cost_estimate=cost,
    )(x2d, w1_p, b1_p, w2_p, b2_p)

    return out2d[:M, :d_model].reshape(batch, seq, d_model)


def init_params(key, d_model, d_ff, dtype=jnp.float32):
    """Deterministic init mirroring nn.Linear's default U(-1/sqrt(in), 1/sqrt(in)).
    Weights are stored pre-transposed as (in_features, out_features)."""
    k1, k2, k3, k4 = jax.random.split(key, 4)
    bound1 = 1.0 / math.sqrt(d_model)
    bound2 = 1.0 / math.sqrt(d_ff)
    w1 = jax.random.uniform(k1, (d_model, d_ff), dtype, -bound1, bound1)
    b1 = jax.random.uniform(k2, (d_ff,), dtype, -bound1, bound1)
    w2 = jax.random.uniform(k3, (d_ff, d_model), dtype, -bound2, bound2)
    b2 = jax.random.uniform(k4, (d_model,), dtype, -bound2, bound2)
    return w1, b1, w2, b2


def _reference(x, w1, b1, w2, b2):
    return jnp.maximum(x @ w1 + b1, 0.0) @ w2 + b2


if __name__ == "__main__":
    key = jax.random.PRNGKey(0)
    kx, kp, kx2, kp2 = jax.random.split(key, 4)

    # Test 1: small shapes, f32, strict check.
    batch, seq, d_model, d_ff = 2, 8, 32, 64
    x = jax.random.normal(kx, (batch, seq, d_model), jnp.float32)
    w1, b1, w2, b2 = init_params(kp, d_model, d_ff)

    out = feed_forward_block(x, w1, b1, w2, b2)
    out = jax.block_until_ready(out)
    ref = _reference(x, w1, b1, w2, b2)
    assert out.shape == (batch, seq, d_model)
    assert jnp.allclose(out, ref, atol=1e-5, rtol=1e-5)

    # Test 2: bf16 MXU fast path, f32 accumulation (loose tolerance).
    out_bf16 = feed_forward_block(x, w1, b1, w2, b2, compute_dtype=jnp.bfloat16)
    out_bf16 = jax.block_until_ready(out_bf16)
    assert jnp.allclose(out_bf16, ref, atol=5e-2, rtol=5e-2)

    # Test 3: awkward (non-aligned) shapes exercise the padding path.
    b3, s3, dm3, dff3 = 2, 5, 48, 80
    x3 = jax.random.normal(kx2, (b3, s3, dm3), jnp.float32)
    p3 = init_params(kp2, dm3, dff3)
    out3 = jax.block_until_ready(feed_forward_block(x3, *p3))
    assert out3.shape == (b3, s3, dm3)
    assert jnp.allclose(out3, _reference(x3, *p3), atol=1e-5, rtol=1e-5)

    print("KERNEL_OK")
</pallas_src>

<mosaic_0001>
module attributes {stable_mosaic.version = 11 : i64} {
  func.func @ffn_kernel(%arg0: i32, %arg1: i32, %arg2: memref<16x128xf32, #tpu.memory_space<vmem>>, %arg3: memref<128x128xf32, #tpu.memory_space<vmem>>, %arg4: memref<1x128xf32, #tpu.memory_space<vmem>>, %arg5: memref<128x128xf32, #tpu.memory_space<vmem>>, %arg6: memref<1x128xf32, #tpu.memory_space<vmem>>, %arg7: memref<16x128xf32, #tpu.memory_space<vmem>>, %arg8: memref<16x128xf32, #tpu.memory_space<vmem>>) attributes {dimension_semantics = [#tpu.dimension_semantics<parallel>, #tpu.dimension_semantics<arbitrary>], iteration_bounds = array<i64: 1, 1>, scalar_prefetch = 0 : i64, scratch_operands = 1 : i64, tpu.core_type = #tpu.core_type<tc>, window_params = [{transform_indices = @transform_0, window_bounds = array<i64: 16, 128>}, {transform_indices = @transform_1, window_bounds = array<i64: 128, 128>}, {transform_indices = @transform_2, window_bounds = array<i64: 1, 128>}, {transform_indices = @transform_3, window_bounds = array<i64: 128, 128>}, {pipeline_mode = #tpu.pipeline_mode<synchronous>, transform_indices = @transform_4, window_bounds = array<i64: 1, 128>}, {transform_indices = @transform_5, window_bounds = array<i64: 16, 128>}]} {
    %c0_i32 = arith.constant 0 : i32
    %0 = arith.cmpi eq, %arg1, %c0_i32 : i32
    %1 = arith.extui %0 : i1 to i32
    %c0_i32_0 = arith.constant 0 : i32
    %2 = arith.cmpi ne, %1, %c0_i32_0 : i32
    scf.if %2 {
      %cst_16 = arith.constant 0.000000e+00 : f32
      %19 = vector.broadcast %cst_16 : f32 to vector<16x128xf32>
      %c0_17 = arith.constant 0 : index
      %c0_18 = arith.constant 0 : index
      %20 = vector.load %arg8[%c0_17, %c0_18] : memref<16x128xf32, #tpu.memory_space<vmem>>, vector<16x128xf32>
      tpu.vector_store %arg8[%c0_17, %c0_18], %19 {strides = array<i32>} : memref<16x128xf32, #tpu.memory_space<vmem>>, vector<16x128xf32>,
    } else {
    }
    %c0 = arith.constant 0 : index
    %c0_1 = arith.constant 0 : index
    %3 = vector.load %arg2[%c0, %c0_1] : memref<16x128xf32, #tpu.memory_space<vmem>>, vector<16x128xf32>
    %c0_2 = arith.constant 0 : index
    %c0_3 = arith.constant 0 : index
    %4 = vector.load %arg3[%c0_2, %c0_3] : memref<128x128xf32, #tpu.memory_space<vmem>>, vector<128x128xf32>
    %cst = arith.constant dense<0.000000e+00> : vector<16x128xf32>
    %5 = tpu.matmul %3, %4, %cst {dimension_numbers = #tpu.dot_dimension_numbers<[1], [0], [0], [1], [0, 0, 1, 1], [], []>} : vector<16x128xf32>, vector<128x128xf32>, vector<16x128xf32> -> vector<16x128xf32>
    %c0_4 = arith.constant 0 : index
    %c0_5 = arith.constant 0 : index
    %6 = vector.load %arg4[%c0_4, %c0_5] : memref<1x128xf32, #tpu.memory_space<vmem>>, vector<1x128xf32>
    %7 = vector.broadcast %6 : vector<1x128xf32> to vector<16x128xf32>
    %8 = arith.addf %5, %7 : vector<16x128xf32>
    %cst_6 = arith.constant 0.000000e+00 : f32
    %9 = vector.broadcast %cst_6 : f32 to vector<16x128xf32>
    %10 = arith.maximumf %8, %9 : vector<16x128xf32>
    %c0_7 = arith.constant 0 : index
    %c0_8 = arith.constant 0 : index
    %11 = vector.load %arg8[%c0_7, %c0_8] : memref<16x128xf32, #tpu.memory_space<vmem>>, vector<16x128xf32>
    %c0_9 = arith.constant 0 : index
    %c0_10 = arith.constant 0 : index
    %12 = vector.load %arg5[%c0_9, %c0_10] : memref<128x128xf32, #tpu.memory_space<vmem>>, vector<128x128xf32>
    %cst_11 = arith.constant dense<0.000000e+00> : vector<16x128xf32>
    %13 = tpu.matmul %10, %12, %cst_11 {dimension_numbers = #tpu.dot_dimension_numbers<[1], [0], [0], [1], [0, 0, 1, 1], [], []>} : vector<16x128xf32>, vector<128x128xf32>, vector<16x128xf32> -> vector<16x128xf32>
    %14 = arith.addf %11, %13 : vector<16x128xf32>
    %c0_12 = arith.constant 0 : index
    %c0_13 = arith.constant 0 : index
    %15 = vector.load %arg8[%c0_12, %c0_13] : memref<16x128xf32, #tpu.memory_space<vmem>>, vector<16x128xf32>
    tpu.vector_store %arg8[%c0_12, %c0_13], %14 {strides = array<i32>} : memref<16x128xf32, #tpu.memory_space<vmem>>, vector<16x128xf32>,
    %c0_i32_14 = arith.constant 0 : i32
    %16 = arith.cmpi eq, %arg1, %c0_i32_14 : i32
    %17 = arith.extui %16 : i1 to i32
    %c0_i32_15 = arith.constant 0 : i32
    %18 = arith.cmpi ne, %17, %c0_i32_15 : i32
    scf.if %18 {
      %c0_16 = arith.constant 0 : index
      %c0_17 = arith.constant 0 : index
      %19 = vector.load %arg8[%c0_16, %c0_17] : memref<16x128xf32, #tpu.memory_space<vmem>>, vector<16x128xf32>
      %c0_18 = arith.constant 0 : index
      %c0_19 = arith.constant 0 : index
      %20 = vector.load %arg6[%c0_18, %c0_19] : memref<1x128xf32, #tpu.memory_space<vmem>>, vector<1x128xf32>
      %21 = vector.broadcast %20 : vector<1x128xf32> to vector<16x128xf32>
      %22 = arith.addf %19, %21 : vector<16x128xf32>
      %c0_20 = arith.constant 0 : index
      %c0_21 = arith.constant 0 : index
      %23 = vector.load %arg7[%c0_20, %c0_21] : memref<16x128xf32, #tpu.memory_space<vmem>>, vector<16x128xf32>
      tpu.vector_store %arg7[%c0_20, %c0_21], %22 {strides = array<i32>} : memref<16x128xf32, #tpu.memory_space<vmem>>, vector<16x128xf32>,
    } else {
    }
    return
  }
  func.func @transform_0(%arg0: i32, %arg1: i32) -> (i32, i32) {
    %c0_i32 = arith.constant 0 : i32
    %c0_i32_0 = arith.constant 0 : i32
    return %arg0, %c0_i32 : i32, i32
  }
  func.func @transform_1(%arg0: i32, %arg1: i32) -> (i32, i32) {
    %c0_i32 = arith.constant 0 : i32
    %c0_i32_0 = arith.constant 0 : i32
    return %c0_i32, %arg1 : i32, i32
  }
  func.func @transform_2(%arg0: i32, %arg1: i32) -> (i32, i32) {
    %c0_i32 = arith.constant 0 : i32
    %c0_i32_0 = arith.constant 0 : i32
    return %c0_i32, %arg1 : i32, i32
  }
  func.func @transform_3(%arg0: i32, %arg1: i32) -> (i32, i32) {
    %c0_i32 = arith.constant 0 : i32
    %c0_i32_0 = arith.constant 0 : i32
    return %arg1, %c0_i32 : i32, i32
  }
  func.func @transform_4(%arg0: i32, %arg1: i32) -> (i32, i32) {
    %c0_i32 = arith.constant 0 : i32
    %c0_i32_0 = arith.constant 0 : i32
    %c0_i32_1 = arith.constant 0 : i32
    return %c0_i32, %c0_i32_0 : i32, i32
  }
  func.func @transform_5(%arg0: i32, %arg1: i32) -> (i32, i32) {
    %c0_i32 = arith.constant 0 : i32
    %c0_i32_0 = arith.constant 0 : i32
    return %arg0, %c0_i32 : i32, i32
  }
}

</mosaic_0001>

<llo_original>
// kernel: tpu_custom_call.1
$region0: #{tpu_custom_call.1}
  #allocation0 [shape = 'u32[]', space=smem, size = 0x4, offset = 0x4, fixed_abs, tag = 'smem constant byte address 0x4 - core index']
  #allocation1 [shape = 'u32[72,128]{1,0:T(1,128)}', space=vmem, size = 0x9000, scoped, tag = 'internal scratch']
  #allocation2 [shape = 'f32[16,128]{1,0:T(8,128)}', space=vmem, size = 0x2000, scoped, tag = 'scratch operand']
  %s0 = inlined_call_operand.hbm [shape: f32[16,128], index: 0, kind: input, shape index: {}]
  %s1 = inlined_call_operand.hbm [shape: f32[128,128], index: 1, kind: input, shape index: {}]
  %s2 = inlined_call_operand.vmem [shape: f32[1,128], index: 2, kind: input, shape index: {}]
  %s3 = inlined_call_operand.hbm [shape: f32[128,128], index: 3, kind: input, shape index: {}]
  %s4 = inlined_call_operand.vmem [shape: f32[1,128], index: 4, kind: input, shape index: {}]
  %s5 = inlined_call_operand.hbm [shape: f32[16,128], index: 5, kind: output, shape index: {}]
  %s6 = sld [smem:[#allocation0]]
  $region50: #{tpu_custom_call.1} parent=0
    _
  %s8 = ssub.s32 1, %s6
  %s9 = scalar_select 0, %s8, %s6
  $region1: #{tpu_custom_call.1} parent=0
    #allocation3 [shape = 'u8[8192]{0}', space=vmem, size = 0x2000, scoped, tag = 'input window, operand 0, single buffered']
    #allocation4 [shape = 's32[1]{0}', space=sflag, size = 0x4, scoped, tag = 'scoped memory for tpu_custom_call.1']
    #allocation5 [shape = 's32[1]{0}', space=sflag, size = 0x4, scoped, tag = 'scoped memory for tpu_custom_call.1']
    #allocation6 [shape = 'u8[65536]{0}', space=vmem, size = 0x10000, scoped, tag = 'input window, operand 1, single buffered']
    #allocation7 [shape = 's32[1]{0}', space=sflag, size = 0x4, scoped, tag = 'scoped memory for tpu_custom_call.1']
    #allocation8 [shape = 'u8[65536]{0}', space=vmem, size = 0x10000, scoped, tag = 'input window, operand 3, single buffered']
    #allocation9 [shape = 'u8[8192]{0}', space=vmem, size = 0x2000, scoped, tag = 'output window, operand 0, single buffered']
    %10 = vsyncpa [#allocation4], 0
    %11 = vsyncpa [#allocation7], 0
    %12 = vsyncpa [#allocation5], 0
    // Predicated region
    $region2: #{tpu_custom_call.1} parent=1 // pred_check
      _
    $region3: #{tpu_custom_call.1} parent=1 // pred_check_branch
      %14 = sbr.rel (0) target = $region5
    $region4: #{tpu_custom_call.1} parent=1 // pred_region
      %16 = vsyncadd [#allocation4], 0
      %s17 = sshll.u32 %s0, 4
      %s18 = int_to_ptr.hbm [resolvable:$true] %s17
      %s19 = sshll.u32 [#allocation3], 4
      %s20 = int_to_ptr.vmem [resolvable:$true] %s19
      %25 = dma.hbm_to_vmem [thread:$0]  %s18, 256, %s20, [#allocation4], 128, 128, 8
    $region5: #{tpu_custom_call.1} parent=1 // pred_fallthru
      _
    // Predicated region
    $region6: #{tpu_custom_call.1} parent=1 // pred_check
      _
    $region7: #{tpu_custom_call.1} parent=1 // pred_check_branch
      %27 = sbr.rel (0) target = $region9
    $region8: #{tpu_custom_call.1} parent=1 // pred_region
      %29 = vsyncadd [#allocation7], 0
      %s30 = sshll.u32 %s1, 4
      %s31 = int_to_ptr.hbm [resolvable:$true] %s30
      %s32 = sshll.u32 [#allocation6], 4
      %s33 = int_to_ptr.vmem [resolvable:$true] %s32
      %38 = dma.hbm_to_vmem [thread:$0]  %s31, 2048, %s33, [#allocation7], 128, 128, 8
    $region9: #{tpu_custom_call.1} parent=1 // pred_fallthru
      _
    // Predicated region
    $region10: #{tpu_custom_call.1} parent=1 // pred_check
      _
    $region11: #{tpu_custom_call.1} parent=1 // pred_check_branch
      %40 = sbr.rel (0) target = $region13
    $region12: #{tpu_custom_call.1} parent=1 // pred_region
      _
    $region13: #{tpu_custom_call.1} parent=1 // pred_fallthru
      _
    // Predicated region
    $region14: #{tpu_custom_call.1} parent=1 // pred_check
      _
    $region15: #{tpu_custom_call.1} parent=1 // pred_check_branch
      %42 = sbr.rel (0) target = $region17
    $region16: #{tpu_custom_call.1} parent=1 // pred_region
      %44 = vsyncadd [#allocation7], 0
      %s45 = sshll.u32 %s3, 4
      %s46 = int_to_ptr.hbm [resolvable:$true] %s45
      %s47 = sshll.u32 [#allocation8], 4
      %s48 = int_to_ptr.vmem [resolvable:$true] %s47
      %53 = dma.hbm_to_vmem [thread:$0]  %s46, 2048, %s48, [#allocation7], 128, 128, 8
    $region17: #{tpu_custom_call.1} parent=1 // pred_fallthru
      _
    // Predicated region
    $region18: #{tpu_custom_call.1} parent=1 // pred_check
      _
    $region19: #{tpu_custom_call.1} parent=1 // pred_check_branch
      %55 = sbr.rel (0) target = $region21
    $region20: #{tpu_custom_call.1} parent=1 // pred_region
      _
    $region21: #{tpu_custom_call.1} parent=1 // pred_fallthru
      _
    // Predicated region
    $region22: #{tpu_custom_call.1} parent=1 // pred_check
      _
    $region23: #{tpu_custom_call.1} parent=1 // pred_check_branch
      %57 = sbr.rel (0) target = $region25
    $region24: #{tpu_custom_call.1} parent=1 // pred_region
      %59 = dma.done [#allocation4], 256
    $region25: #{tpu_custom_call.1} parent=1 // pred_fallthru
      _
    // Predicated region
    $region26: #{tpu_custom_call.1} parent=1 // pred_check
      _
    $region27: #{tpu_custom_call.1} parent=1 // pred_check_branch
      %61 = sbr.rel (0) target = $region29
    $region28: #{tpu_custom_call.1} parent=1 // pred_region
      %63 = dma.done [#allocation7], 2048
    $region29: #{tpu_custom_call.1} parent=1 // pred_fallthru
      _
    // Predicated region
    $region30: #{tpu_custom_call.1} parent=1 // pred_check
      _
    $region31: #{tpu_custom_call.1} parent=1 // pred_check_branch
      %65 = sbr.rel (0) target = $region33
    $region32: #{tpu_custom_call.1} parent=1 // pred_region
      %67 = dma.done [#allocation7], 2048
    $region33: #{tpu_custom_call.1} parent=1 // pred_fallthru
      _
    %p68 = scmp.eq.s32.totalorder 0, 0
    // Predicated region
    $region34: #{tpu_custom_call.1} parent=1 // pred_check
      %p69 = pneg %p68
    $region35: #{tpu_custom_call.1} parent=1 // pred_check_branch
      %71 = sbr.rel (%p69) target = $region37
    $region36: #{tpu_custom_call.1} parent=1 // pred_region
      %72 = vst [vmem:[#allocation2] sm:$0xff] 0.0
      %73 = vst [vmem:[#allocation2 + $0x8] sm:$0xff] 0.0
    $region37: #{tpu_custom_call.1} parent=1 // pred_fallthru
      _
    %v74 = vld [vmem:[#allocation3] sm:$0xff]
    %v75 = vld [vmem:[#allocation3 + $0x8] sm:$0xff]
    %v76 = vld [vmem:[#allocation6] sm:$0xff]
    %v77 = vld [vmem:[#allocation6 + $0x8] sm:$0xff]
    %v78 = vld [vmem:[#allocation6 + $0x10] sm:$0xff]
    %v79 = vld [vmem:[#allocation6 + $0x18] sm:$0xff]
    %v80 = vld [vmem:[#allocation6 + $0x20] sm:$0xff]
    %v81 = vld [vmem:[#allocation6 + $0x28] sm:$0xff]
    %v82 = vld [vmem:[#allocation6 + $0x30] sm:$0xff]
    %v83 = vld [vmem:[#allocation6 + $0x38] sm:$0xff]
    %v84 = vld [vmem:[#allocation6 + $0x40] sm:$0xff]
    %v85 = vld [vmem:[#allocation6 + $0x48] sm:$0xff]
    %v86 = vld [vmem:[#allocation6 + $0x50] sm:$0xff]
    %v87 = vld [vmem:[#allocation6 + $0x58] sm:$0xff]
    %v88 = vld [vmem:[#allocation6 + $0x60] sm:$0xff]
    %v89 = vld [vmem:[#allocation6 + $0x68] sm:$0xff]
    %v90 = vld [vmem:[#allocation6 + $0x70] sm:$0xff]
    %v91 = vld [vmem:[#allocation6 + $0x78] sm:$0xff]
    %v92 = vld [vmem:[%s2] sm:$0x1]
    %v94 = vperm.slane %v92, 0
    %96 = vmatpush.msra.mxu0 %v91
    %97 = vmatpush.msra.mxu0 %v90
    %98 = vmatpush.msra.mxu0 %v89
    %99 = vmatpush.msra.mxu0 %v88
    %100 = vmatpush.msra.mxu0 %v87
    %101 = vmatpush.msra.mxu0 %v86
    %102 = vmatpush.msra.mxu0 %v85
    %103 = vmatpush.msra.mxu0 %v84
    %104 = vmatpush.msra.mxu0 %v83
    %105 = vmatpush.msra.mxu0 %v82
    %106 = vmatpush.msra.mxu0 %v81
    %107 = vmatpush.msra.mxu0 %v80
    %108 = vmatpush.msra.mxu0 %v79
    %109 = vmatpush.msra.mxu0 %v78
    %110 = vmatpush.msra.mxu0 %v77
    %111 = vmatpush.msra.mxu0 %v76
    %112 = vmatmul.f32.gmra.mxu0 %v74
    %v113 = vpop.f32.mrf.mxu0
    %v114 = vadd.f32 %v94, %v113
    %115 = vmatmul.f32.gmra.mxu0 %v75
    %v116 = vpop.f32.mrf.mxu0
    %v117 = vadd.f32 %v94, %v116
    %118 = vdwg.mxu0
    %v119 = vmax.f32 %v114, 0.0
    %v120 = vmax.f32 %v117, 0.0
    %v121 = vld [vmem:[#allocation2] sm:$0xff]
    %v122 = vld [vmem:[#allocation2 + $0x8] sm:$0xff]
    %v123 = vld [vmem:[#allocation8] sm:$0xff]
    %v124 = vld [vmem:[#allocation8 + $0x8] sm:$0xff]
    %v125 = vld [vmem:[#allocation8 + $0x10] sm:$0xff]
    %v126 = vld [vmem:[#allocation8 + $0x18] sm:$0xff]
    %v127 = vld [vmem:[#allocation8 + $0x20] sm:$0xff]
    %v128 = vld [vmem:[#allocation8 + $0x28] sm:$0xff]
    %v129 = vld [vmem:[#allocation8 + $0x30] sm:$0xff]
    %v130 = vld [vmem:[#allocation8 + $0x38] sm:$0xff]
    %v131 = vld [vmem:[#allocation8 + $0x40] sm:$0xff]
    %v132 = vld [vmem:[#allocation8 + $0x48] sm:$0xff]
    %v133 = vld [vmem:[#allocation8 + $0x50] sm:$0xff]
    %v134 = vld [vmem:[#allocation8 + $0x58] sm:$0xff]
    %v135 = vld [vmem:[#allocation8 + $0x60] sm:$0xff]
    %v136 = vld [vmem:[#allocation8 + $0x68] sm:$0xff]
    %v137 = vld [vmem:[#allocation8 + $0x70] sm:$0xff]
    %v138 = vld [vmem:[#allocation8 + $0x78] sm:$0xff]
    %139 = vmatpush.msra.mxu0 %v138
    %140 = vmatpush.msra.mxu0 %v137
    %141 = vmatpush.msra.mxu0 %v136
    %142 = vmatpush.msra.mxu0 %v135
    %143 = vmatpush.msra.mxu0 %v134
    %144 = vmatpush.msra.mxu0 %v133
    %145 = vmatpush.msra.mxu0 %v132
    %146 = vmatpush.msra.mxu0 %v131
    %147 = vmatpush.msra.mxu0 %v130
    %148 = vmatpush.msra.mxu0 %v129
    %149 = vmatpush.msra.mxu0 %v128
    %150 = vmatpush.msra.mxu0 %v127
    %151 = vmatpush.msra.mxu0 %v126
    %152 = vmatpush.msra.mxu0 %v125
    %153 = vmatpush.msra.mxu0 %v124
    %154 = vmatpush.msra.mxu0 %v123
    %155 = vmatmul.f32.gmra.mxu0 %v119
    %v156 = vpop.f32.mrf.mxu0
    %v157 = vadd.f32 0.0, %v156
    %158 = vmatmul.f32.gmra.mxu0 %v120
    %v159 = vpop.f32.mrf.mxu0
    %v160 = vadd.f32 0.0, %v159
    %161 = vdwg.mxu0
    %v162 = vadd.f32 %v121, %v157
    %v163 = vadd.f32 %v122, %v160
    %164 = vst [vmem:[#allocation2] sm:$0xff] %v162
    %165 = vst [vmem:[#allocation2 + $0x8] sm:$0xff] %v163
    // Predicated region
    $region38: #{tpu_custom_call.1} parent=1 // pred_check
      %p166 = pneg %p68
    $region39: #{tpu_custom_call.1} parent=1 // pred_check_branch
      %168 = sbr.rel (%p166) target = $region41
    $region40: #{tpu_custom_call.1} parent=1 // pred_region
      %v169 = vld [vmem:[#allocation2] sm:$0xff]
      %v170 = vld [vmem:[#allocation2 + $0x8] sm:$0xff]
      %v171 = vld [vmem:[%s4] sm:$0x1]
      %v173 = vperm.slane %v171, 0
      %v175 = vadd.f32 %v169, %v173
      %v176 = vadd.f32 %v170, %v173
      %177 = vst [vmem:[#allocation9] sm:$0xff] %v175
      %178 = vst [vmem:[#allocation9 + $0x8] sm:$0xff] %v176
    $region41: #{tpu_custom_call.1} parent=1 // pred_fallthru
      _
    // Predicated region
    $region42: #{tpu_custom_call.1} parent=1 // pred_check
      _
    $region43: #{tpu_custom_call.1} parent=1 // pred_check_branch
      %180 = sbr.rel (0) target = $region45
    $region44: #{tpu_custom_call.1} parent=1 // pred_region
      %182 = vsyncadd [#allocation5], 0
      %s183 = sshll.u32 [#allocation9], 4
      %s184 = int_to_ptr.vmem [resolvable:$true] %s183
      %s185 = sshll.u32 %s5, 4
      %s186 = int_to_ptr.hbm [resolvable:$true] %s185
      %191 = dma.vmem_to_hbm [thread:$0]  %s184, 256, %s186, [#allocation5], 128, 128, 8
    $region45: #{tpu_custom_call.1} parent=1 // pred_fallthru
      _
    // Predicated region
    $region46: #{tpu_custom_call.1} parent=1 // pred_check
      _
    $region47: #{tpu_custom_call.1} parent=1 // pred_check_branch
      %193 = sbr.rel (0) target = $region49
    $region48: #{tpu_custom_call.1} parent=1 // pred_region
      %195 = dma.done [#allocation5], 256
    $region49: #{tpu_custom_call.1} parent=1 // pred_fallthru
      _
    %196 = vsyncpa [#allocation4], 1
    %197 = vsyncpa [#allocation7], 1
    %198 = vsyncpa [#allocation5], 1

</llo_original>
